<compile_context>
chip_gen: v7x
topology: tpu7x:2x2x1
jax: 0.10.0
libtpu: 0.0.40
codegen_flags: <defaults>
</compile_context>

<pallas_src>
import jax
import jax.numpy as jnp
from jax.experimental import pallas as pl
from jax.experimental.pallas import tpu as pltpu


# ---------------------------------------------------------------------------
# Kernel: single HBM -> HBM DMA (no VMEM staging, no grid)
# ---------------------------------------------------------------------------
def _hbm_copy_kernel(p_hbm, o_hbm, sem):
    cp = pltpu.make_async_copy(p_hbm, o_hbm, sem)
    cp.start()
    cp.wait()


def _materialize_copy(x: jax.Array) -> jax.Array:
    """Bit-exact materialization of `x` into a fresh HBM buffer via one DMA."""
    return pl.pallas_call(
        _hbm_copy_kernel,
        out_shape=jax.ShapeDtypeStruct(x.shape, x.dtype),
        in_specs=[pl.BlockSpec(memory_space=pl.ANY)],
        out_specs=pl.BlockSpec(memory_space=pl.ANY),
        scratch_shapes=[pltpu.SemaphoreType.DMA(())],
    )(x)


# ---------------------------------------------------------------------------
# Forward (matches ParameterSlice_export.forward: returns the parameter)
# ---------------------------------------------------------------------------
def parameter_slice_export_forward(
    cls_token: jax.Array, *, force_kernel: bool = False
) -> jax.Array:
    """Equivalent of ParameterSlice_export.forward().

    cls_token: (dim1, dim2, max_embedding_dim)

    Default: pure identity — return the parameter, launch nothing.
    force_kernel=True: materialize a fresh copy via a single HBM->HBM DMA
    (only useful when a distinct output buffer is a hard requirement).
    """
    if not force_kernel:
        return cls_token
    return _materialize_copy(cls_token)


# ---------------------------------------------------------------------------
# Demo / self-test
# ---------------------------------------------------------------------------
if __name__ == "__main__":
    key = jax.random.PRNGKey(0)
    k0, k1 = jax.random.split(key)

    # 1) Canonical ViT cls-token shape: (dim1=1, dim2=1, max_embedding_dim=128).
    #    Default forward == identity, no kernel launched.
    cls_token = jax.random.normal(k0, (1, 1, 128), dtype=jnp.float32)
    out_fast = jax.block_until_ready(parameter_slice_export_forward(cls_token))
    assert out_fast.shape == cls_token.shape
    assert out_fast.dtype == cls_token.dtype
    assert bool(jnp.array_equal(out_fast, cls_token))

    # 2) Same parameter, forced through the DMA materialization kernel.
    out_dma = jax.block_until_ready(
        parameter_slice_export_forward(cls_token, force_kernel=True)
    )
    assert out_dma.shape == cls_token.shape
    assert out_dma.dtype == cls_token.dtype
    assert bool(jnp.array_equal(out_dma, cls_token)), "DMA copy != parameter"

    # 3) Awkward, non-(8,128)-tileable shape through the same kernel: the
    #    HBM->HBM DMA is shape-agnostic (no tiling/divisibility fallbacks).
    odd_token = jax.random.normal(k1, (2, 3, 40), dtype=jnp.float32)
    out_odd = jax.block_until_ready(
        parameter_slice_export_forward(odd_token, force_kernel=True)
    )
    assert out_odd.shape == odd_token.shape
    assert out_odd.dtype == odd_token.dtype
    assert bool(jnp.array_equal(out_odd, odd_token)), "DMA copy != parameter"

    print("KERNEL_OK")
</pallas_src>

<mosaic_0001>
module attributes {stable_mosaic.version = 11 : i64} {
  func.func @_hbm_copy_kernel(%arg0: memref<1x1x128xf32, #tpu.memory_space<any>>, %arg1: memref<1x1x128xf32, #tpu.memory_space<any>>, %arg2: memref<!tpu.dma_semaphore, #tpu.memory_space<semaphore_mem>>) attributes {dimension_semantics = [], scalar_prefetch = 0 : i64, scratch_operands = 1 : i64, tpu.core_type = #tpu.core_type<tc>} {
    tpu.enqueue_dma source(%arg0 : memref<1x1x128xf32, #tpu.memory_space<any>>) target(%arg1 : memref<1x1x128xf32, #tpu.memory_space<any>>) target_semaphore(%arg2 : memref<!tpu.dma_semaphore, #tpu.memory_space<semaphore_mem>>)
    tpu.wait_dma2 semaphore(%arg2 : memref<!tpu.dma_semaphore, #tpu.memory_space<semaphore_mem>>) src(%arg0 : memref<1x1x128xf32, #tpu.memory_space<any>>) dst(%arg1 : memref<1x1x128xf32, #tpu.memory_space<any>>)
    return
  }
}

</mosaic_0001>

<llo_original>
// kernel: tpu_custom_call.1
$region0: #{tpu_custom_call.1}
  #allocation0 [shape = 'u32[]', space=smem, size = 0x4, offset = 0x4, fixed_abs, tag = 'smem constant byte address 0x4 - core index']
  #allocation1 [shape = 'u32[144,128]{1,0:T(1,128)}', space=vmem, size = 0x12000, scoped, tag = 'internal scratch']
  #allocation2 [shape = 's32[1]{0}', space=sflag, size = 0x4, scoped, tag = 'scratch operand']
  #allocation3 [shape = 's32[]', space=sflag, size = 0x4, offset = 0, fixed_abs, tag = 'sflag constant byte address 0x0 - dummy sync flag']
  #allocation4 [shape = 'u32[0]{0}', space=smem, size = 0, offset = 0, fixed_abs, tag = 'smem constant byte address 0x0 - null']
  %s0 = inlined_call_operand.hbm [shape: f32[1,1,128], index: 0, kind: input, shape index: {}]
  %s1 = inlined_call_operand.hbm [shape: f32[1,1,128], index: 1, kind: output, shape index: {}]
  %s2 = sld [smem:[#allocation0]]
  $region2: #{tpu_custom_call.1} parent=0
    _
  %s4 = ssub.s32 1, %s2
  %s5 = scalar_select 0, %s4, %s2
  %s7 = sshll.u32 1, 14
  %s8 = sxor.u32 4294967295, %s7
  %s11 = sshll.u32 3, 24
  %s12 = sxor.u32 4294967295, %s11
  %s13 = sand.u32 0, %s12
  %s15 = sor.u32 %s13, 0
  %18 = dma.general %s0, 16, %s1, [#allocation2], [#allocation3], [#allocation4], %s15, 0
  %s19 = smul.u32 1, 1
  %s20 = smul.u32 %s19, 1
  %s21 = sshll.u32 %s20, 4
  %22 = dma.done [#allocation2], %s21
  %23 = vsyncmov [#allocation2]
  %s24 = vpop.sfrf %23
  %p25 = scmp.eq.s32.totalorder %s24, 0
  %p26 = pneg %p25
  %28 = shalt.err (%p26)

</llo_original>
